<compile_context>
chip_gen: v5e
topology: v5e:2x2
jax: 0.10.0
libtpu: 0.0.40
codegen_flags: <defaults>
</compile_context>

<pallas_src>
import math

import jax
import jax.numpy as jnp
from jax.experimental import pallas as pl
from jax.experimental.pallas import tpu as pltpu


def _identity_kernel(x_ref, o_ref):
    # Pure pass-through: copy the current VMEM tile to the output tile.
    o_ref[...] = x_ref[...]


def _lane_dense_view(shape):
    """Pick a (rows, lanes) 2-D view of the flattened array with lanes a
    multiple of 128 and rows a multiple of 8, if one exists. Else None."""
    total = math.prod(shape) if len(shape) > 0 else 1
    for lanes in (512, 256, 128):
        if total % (8 * lanes) == 0:
            return total // lanes, lanes
    return None


def identity(x, *, max_row_tile=1024):
    """Pallas TPU implementation of Identity.forward: returns a copy of x."""
    orig_shape = x.shape

    view = _lane_dense_view(orig_shape)
    if view is not None:
        rows, lanes = view
        x2 = x.reshape(rows, lanes)
    else:
        # Fallback: simple 2-D view, single full-extent block (always legal).
        if x.ndim == 0:
            x2 = x.reshape(1, 1)
        elif x.ndim == 1:
            x2 = x.reshape(1, -1)
        else:
            x2 = x.reshape(-1, x.shape[-1])
        rows, lanes = x2.shape

    # Row tile: as big as is comfortable with double buffering; must be a
    # multiple of 8 (it is: max_row_tile=1024) or equal the full row extent.
    tb = rows if rows <= max_row_tile else max_row_tile
    grid = (pl.cdiv(rows, tb),)

    out = pl.pallas_call(
        _identity_kernel,
        out_shape=jax.ShapeDtypeStruct((rows, lanes), x2.dtype),
        grid=grid,
        in_specs=[pl.BlockSpec((tb, lanes), lambda i: (i, 0))],
        out_specs=pl.BlockSpec((tb, lanes), lambda i: (i, 0)),
        compiler_params=pltpu.CompilerParams(
            dimension_semantics=("parallel",),  # independent tiles; v7x 2-TC friendly
        ),
    )(x2)
    return out.reshape(orig_shape)


if __name__ == "__main__":
    key = jax.random.PRNGKey(0)
    k1, k2, k3 = jax.random.split(key, 3)

    # 1) Typical activation tensor (lane-dense path), native float32.
    x1 = jax.random.normal(k1, (2, 4, 16, 16), dtype=jnp.float32)
    y1 = jax.block_until_ready(identity(x1))
    assert y1.shape == x1.shape and y1.dtype == x1.dtype
    assert jnp.array_equal(y1, x1)

    # 2) Native bf16 input (no wrapper up-cast; bytes copied as-is).
    x2 = jax.random.normal(k2, (2, 8, 32)).astype(jnp.bfloat16)
    y2 = jax.block_until_ready(identity(x2))
    assert y2.shape == x2.shape and y2.dtype == x2.dtype
    assert jnp.array_equal(y2, x2)

    # 3) Odd shape exercising the full-extent fallback path.
    x3 = jax.random.normal(k3, (3, 5, 7), dtype=jnp.float32)
    y3 = jax.block_until_ready(identity(x3))
    assert y3.shape == x3.shape and y3.dtype == x3.dtype
    assert jnp.array_equal(y3, x3)

    print("KERNEL_OK")
</pallas_src>

<mosaic_0001>
module attributes {stable_mosaic.version = 11 : i64} {
  func.func @_identity_kernel(%arg0: i32, %arg1: memref<8x256xf32, #tpu.memory_space<vmem>>, %arg2: memref<8x256xf32, #tpu.memory_space<vmem>>) attributes {dimension_semantics = [#tpu.dimension_semantics<parallel>], iteration_bounds = array<i64: 1>, scalar_prefetch = 0 : i64, scratch_operands = 0 : i64, tpu.core_type = #tpu.core_type<tc>, window_params = [{transform_indices = @transform_0, window_bounds = array<i64: 8, 256>}, {transform_indices = @transform_1, window_bounds = array<i64: 8, 256>}]} {
    %c0 = arith.constant 0 : index
    %c0_0 = arith.constant 0 : index
    %0 = vector.load %arg1[%c0, %c0_0] : memref<8x256xf32, #tpu.memory_space<vmem>>, vector<8x256xf32>
    %c0_1 = arith.constant 0 : index
    %c0_2 = arith.constant 0 : index
    %1 = vector.load %arg2[%c0_1, %c0_2] : memref<8x256xf32, #tpu.memory_space<vmem>>, vector<8x256xf32>
    tpu.vector_store %arg2[%c0_1, %c0_2], %0 {strides = array<i32>} : memref<8x256xf32, #tpu.memory_space<vmem>>, vector<8x256xf32>,
    return
  }
  func.func @transform_0(%arg0: i32) -> (i32, i32) {
    %c0_i32 = arith.constant 0 : i32
    %c0_i32_0 = arith.constant 0 : i32
    return %arg0, %c0_i32 : i32, i32
  }
  func.func @transform_1(%arg0: i32) -> (i32, i32) {
    %c0_i32 = arith.constant 0 : i32
    %c0_i32_0 = arith.constant 0 : i32
    return %arg0, %c0_i32 : i32, i32
  }
}

</mosaic_0001>

<llo_original>
// kernel: tpu_custom_call.1
$region0: #{tpu_custom_call.1}
  #allocation0 [shape = 'u32[]', space=smem, size = 0x4, offset = 0x4, fixed_abs, tag = 'smem constant byte address 0x4 - core index']
  #allocation1 [shape = 'u32[72,128]{1,0:T(1,128)}', space=vmem, size = 0x9000, scoped, tag = 'internal scratch']
  %s0 = inlined_call_operand.hbm [shape: f32[8,256], index: 0, kind: input, shape index: {}]
  %s1 = inlined_call_operand.hbm [shape: f32[8,256], index: 1, kind: output, shape index: {}]
  %s2 = sld [smem:[#allocation0]]
  $region18: #{tpu_custom_call.1} parent=0
    _
  %s4 = ssub.s32 1, %s2
  %s5 = scalar_select 0, %s4, %s2
  $region1: #{tpu_custom_call.1} parent=0
    #allocation2 [shape = 'u8[8192]{0}', space=vmem, size = 0x2000, scoped, tag = 'input window, operand 0, single buffered']
    #allocation3 [shape = 's32[1]{0}', space=sflag, size = 0x4, scoped, tag = 'scoped memory for tpu_custom_call.1']
    #allocation4 [shape = 's32[1]{0}', space=sflag, size = 0x4, scoped, tag = 'scoped memory for tpu_custom_call.1']
    #allocation5 [shape = 'u8[8192]{0}', space=vmem, size = 0x2000, scoped, tag = 'output window, operand 0, single buffered']
    %6 = vsyncpa [#allocation3], 0
    %7 = vsyncpa [#allocation4], 0
    // Predicated region
    $region2: #{tpu_custom_call.1} parent=1 // pred_check
      _
    $region3: #{tpu_custom_call.1} parent=1 // pred_check_branch
      %9 = sbr.rel (0) target = $region5
    $region4: #{tpu_custom_call.1} parent=1 // pred_region
      %11 = vsyncadd [#allocation3], 0
      %s13 = sshll.u32 %s0, 4
      %s14 = int_to_ptr.hbm [resolvable:$true] %s13
      %s15 = sshll.u32 [#allocation2], 4
      %s16 = int_to_ptr.vmem [resolvable:$true] %s15
      %18 = dma.hbm_to_vmem [thread:$0]  %s14, 256, %s16, [#allocation3]
    $region5: #{tpu_custom_call.1} parent=1 // pred_fallthru
      _
    // Predicated region
    $region6: #{tpu_custom_call.1} parent=1 // pred_check
      _
    $region7: #{tpu_custom_call.1} parent=1 // pred_check_branch
      %20 = sbr.rel (0) target = $region9
    $region8: #{tpu_custom_call.1} parent=1 // pred_region
      %22 = dma.done [#allocation3], 256
    $region9: #{tpu_custom_call.1} parent=1 // pred_fallthru
      _
    %v23 = vld [vmem:[#allocation2] sm:$0xff]
    %v24 = vld [vmem:[#allocation2 + $0x8] sm:$0xff]
    %25 = vst [vmem:[#allocation5] sm:$0xff] %v23
    %26 = vst [vmem:[#allocation5 + $0x8] sm:$0xff] %v24
    // Predicated region
    $region10: #{tpu_custom_call.1} parent=1 // pred_check
      _
    $region11: #{tpu_custom_call.1} parent=1 // pred_check_branch
      %28 = sbr.rel (0) target = $region13
    $region12: #{tpu_custom_call.1} parent=1 // pred_region
      %30 = vsyncadd [#allocation4], 0
      %s32 = sshll.u32 [#allocation5], 4
      %s33 = int_to_ptr.vmem [resolvable:$true] %s32
      %s34 = sshll.u32 %s1, 4
      %s35 = int_to_ptr.hbm [resolvable:$true] %s34
      %37 = dma.vmem_to_hbm [thread:$0]  %s33, 256, %s35, [#allocation4]
    $region13: #{tpu_custom_call.1} parent=1 // pred_fallthru
      _
    // Predicated region
    $region14: #{tpu_custom_call.1} parent=1 // pred_check
      _
    $region15: #{tpu_custom_call.1} parent=1 // pred_check_branch
      %39 = sbr.rel (0) target = $region17
    $region16: #{tpu_custom_call.1} parent=1 // pred_region
      %41 = dma.done [#allocation4], 256
    $region17: #{tpu_custom_call.1} parent=1 // pred_fallthru
      _
    %42 = vsyncpa [#allocation3], 1
    %43 = vsyncpa [#allocation4], 1

</llo_original>
